<compile_context>
chip_gen: v7x
topology: tpu7x:2x2x1
jax: 0.10.0
libtpu: 0.0.40
codegen_flags: <defaults>
</compile_context>

<pallas_src>
import functools

import jax
import jax.numpy as jnp
from jax.experimental import pallas as pl
from jax.experimental.pallas import tpu as pltpu


def _vmem_limit_bytes():
    """Generation-aware VMEM limit: ~100 MiB on 128-MiB parts (v5e/v6e),
    ~50 MiB on v7x (64 MiB physical per TensorCore).  Conservative fallback
    if the hardware query is unavailable."""
    cap = None
    try:
        info = pltpu.get_tpu_info()
        cap = getattr(info, "vmem_capacity_bytes", None)
    except Exception:
        cap = None
    if not cap:
        cap = 64 * 1024 * 1024
    return int(min(cap * 0.78, 100 * 1024 * 1024))


def _pick_tb(batch, n, c, num_heads, budget_bytes):
    """Batch-tile size for kernel 1: divides `batch`, is a multiple of 8
    (sublane-dense blocks) or the whole batch, and fits a VMEM budget that
    accounts for the f32 input block, the f32 kv result and the bf16
    k/v/qk copies (the review noted the old estimate undercounted)."""
    # Per batch element (bytes), generously over-counted:
    #   2x-buffered f32 x block (8nc) + in-kernel bf16 copy (2nc)
    #   + f32 kv result (8nc) + bf16 k/v/qk (6nc)
    #   + f32 p_full & promoted-v temp (8nc) + small score/prob tensors.
    per_elem = 32 * n * c + 16 * n * num_heads + 16 * c
    # Double-buffered bf16 weights + head-mask constants.
    weights = 2 * (2 * c * c + 4 * c * c + 4 * c * num_heads)
    cap = max(1, (budget_bytes - weights) // per_elem)
    hi = int(min(batch, cap, 128))
    if batch >= 16:
        # Keep >= 2 grid steps so the "parallel" batch axis can shard across
        # v7x's two TensorCores (negligible cost on single-TC v5e/v6e).
        hi = min(hi, batch // 2)
    hi = max(hi, 1)
    for tb in range(hi, 0, -1):
        if batch % tb == 0 and (tb % 8 == 0 or tb == batch):
            return tb
    for tb in range(hi, 0, -1):
        if batch % tb == 0:
            return tb
    return 1


# ----------------------------------------------------------------------------
# Kernel 1: class-token attention for TB batch elements per grid step.
#   q projection of the class tokens, fused k/v projection of all tokens,
#   head-vectorized scaled-dot-product attention of the cls query.
# All MXU matmuls are bf16 x bf16 with f32 accumulation; the softmax is f32.
# Output: per-batch "natural" head layout, one lane-dense (TB, C) block.
# ----------------------------------------------------------------------------
def _class_attn_kernel(x_ref, xcls_ref, wq_t_ref, wkv_t_ref, hsum_ref,
                       hbroad_ref, out_ref):
    tb, n, c = x_ref.shape
    num_heads = hsum_ref.shape[1]

    # In-kernel bf16 cast of the f32 input block (no wrapper-side cast pass).
    x_bf = x_ref[...].astype(jnp.bfloat16)               # (TB, N, C)
    x2d = x_bf.reshape(tb * n, c)

    # Class-token queries; the attention scale is already folded into wq_t.
    q = jnp.dot(xcls_ref[...].astype(jnp.bfloat16), wq_t_ref[...],
                preferred_element_type=jnp.float32)       # (TB, C) f32

    # Fused k/v projection of all tokens: (TB*N, 2C), f32 accumulation,
    # slices immediately cast down to bf16 to keep intermediates small.
    kv = jnp.dot(x2d, wkv_t_ref[...], preferred_element_type=jnp.float32)
    k = kv[:, :c].reshape(tb, n, c).astype(jnp.bfloat16)
    v = kv[:, c:].reshape(tb, n, c).astype(jnp.bfloat16)

    # Head-vectorized scores (no per-head loop, everything stays lane-dense):
    #   s[b, n, h] = scale * sum_d q[b, h*hc + d] * k[b, n, h*hc + d]
    qk = q.astype(jnp.bfloat16)[:, None, :] * k           # (TB, N, C) bf16
    s = jnp.dot(qk.reshape(tb * n, c), hsum_ref[...],
                preferred_element_type=jnp.float32).reshape(tb, n, num_heads)

    # Softmax over the token axis, in f32; the divide goes to the EUP slot.
    m = jnp.max(s, axis=1, keepdims=True)                 # (TB, 1, H)
    e = jnp.exp(s - m)
    denom = jnp.sum(e, axis=1, keepdims=True)
    p = e * pl.reciprocal(denom, approx=True)             # (TB, N, H) f32

    # Broadcast head probabilities back onto the channel layout (bf16 MXU) and
    # contract over tokens in f32:
    #   out[b, h*hc + d] = sum_n p[b, n, h] * v[b, n, h*hc + d]
    p_full = jnp.dot(p.reshape(tb * n, num_heads).astype(jnp.bfloat16),
                     hbroad_ref[...],
                     preferred_element_type=jnp.float32).reshape(tb, n, c)
    out_ref[...] = jnp.sum(p_full * v.astype(jnp.float32), axis=1
                           ).astype(out_ref.dtype)


# ----------------------------------------------------------------------------
# Kernel 2: output projection (nn.Linear with bias) on the scrambled class
# attention result: y = a @ Wp^T + bp.  Runs once over the whole (B, C) slab.
# (Kept separate from kernel 1 because the module's batch-mixing reshape
#  needs all batch elements before the projection.)
# ----------------------------------------------------------------------------
def _proj_kernel(a_ref, wp_t_ref, bp_ref, out_ref):
    out_ref[...] = (jnp.dot(a_ref[...], wp_t_ref[...],
                            preferred_element_type=jnp.float32)
                    + bp_ref[...]).astype(out_ref.dtype)


@functools.partial(jax.jit, static_argnums=(2,), donate_argnums=(0,))
def class_attention_forward(x, params, num_heads):
    """Pallas TPU implementation of ClassAttention.forward.

    x: (B, N, C) float32 tokens (class token at index 0) -- donated.
    params: dict with 'wq' (C,C), 'wkv' (2C,C), 'wp' (C,C), 'bp' (C,)
            in nn.Linear (out, in) convention.
    """
    B, N, C = x.shape
    H = num_heads
    hc = C // H
    scale = hc ** (-0.5)

    vmem_limit = _vmem_limit_bytes()
    tb = _pick_tb(B, N, C, H, int(vmem_limit * 0.85))

    # bf16 weights for the MXU (accumulation stays f32 in the kernels).  The
    # attention scale is folded into the q projection weights host-side.
    wq_t = (params["wq"].T * scale).astype(jnp.bfloat16)   # (C, C)
    wkv_t = params["wkv"].T.astype(jnp.bfloat16)           # (C, 2C)
    wp_t = params["wp"].T.astype(jnp.bfloat16)             # (C, C)
    bp = params["bp"].reshape(1, C).astype(jnp.float32)

    # Head-sum / head-broadcast constants: hsum[c, h] = 1 iff c // hc == h.
    # 0/1 values are exact in bf16 -> bf16 MXU matmuls in the kernel.
    head_of_c = jnp.arange(C, dtype=jnp.int32) // hc
    hsum = (head_of_c[:, None] == jnp.arange(H, dtype=jnp.int32)[None, :]
            ).astype(jnp.bfloat16)                         # (C, H)
    hbroad = hsum.T                                        # (H, C)

    # Contiguous class-token rows (avoids a sublane-strided in-kernel gather;
    # the duplicate B*C read is negligible).
    x_cls = x[:, 0, :]                                     # (B, C) f32

    # ---- kernel 1: attention, TB batch elements per grid step --------------
    nat = pl.pallas_call(
        _class_attn_kernel,
        grid=(B // tb,),
        in_specs=[
            pl.BlockSpec((tb, N, C), lambda b: (b, 0, 0)),
            pl.BlockSpec((tb, C), lambda b: (b, 0)),
            pl.BlockSpec((C, C), lambda b: (0, 0)),
            pl.BlockSpec((C, 2 * C), lambda b: (0, 0)),
            pl.BlockSpec((C, H), lambda b: (0, 0)),
            pl.BlockSpec((H, C), lambda b: (0, 0)),
        ],
        out_specs=pl.BlockSpec((tb, C), lambda b: (b, 0)),
        out_shape=jax.ShapeDtypeStruct((B, C), jnp.bfloat16),
        compiler_params=pltpu.CompilerParams(
            dimension_semantics=("parallel",),
            vmem_limit_bytes=vmem_limit),
    )(x, x_cls, wq_t, wkv_t, hsum, hbroad)

    # ---- reproduce the module's (attn @ v).transpose(1, 2).reshape(B,1,C) --
    # Tiny (B, C) bf16 layout glue: interleaves head slices across batch
    # elements exactly like the PyTorch code (which keeps the size-1 chunk()
    # dim).  It mixes rows across batch tiles, so it lives between kernels.
    scrambled = nat.reshape(B, H, hc).transpose(1, 0, 2).reshape(B, C)

    # ---- kernel 2: output projection, single step over the whole slab ------
    proj = pl.pallas_call(
        _proj_kernel,
        grid=(1,),
        in_specs=[
            pl.BlockSpec((B, C), lambda i: (0, 0)),
            pl.BlockSpec((C, C), lambda i: (0, 0)),
            pl.BlockSpec((1, C), lambda i: (0, 0)),
        ],
        out_specs=pl.BlockSpec((B, C), lambda i: (0, 0)),
        out_shape=jax.ShapeDtypeStruct((B, C), jnp.float32),
        compiler_params=pltpu.CompilerParams(
            dimension_semantics=("arbitrary",),
            vmem_limit_bytes=vmem_limit),
    )(scrambled, wp_t, bp)

    # ---- in-place class-token update: x is donated, so only row 0 is written
    # (patch tokens never make another HBM round trip, unlike torch.cat). -----
    return x.at[:, 0, :].set(proj)


# ----------------------------------------------------------------------------
# Pure-JAX reference mirroring the PyTorch forward line by line (f32).
# ----------------------------------------------------------------------------
def class_attention_reference(x, params, num_heads):
    B, N, C = x.shape
    hc = C // num_heads
    scale = hc ** (-0.5)

    q_full = x[:, 0] @ params["wq"].T                       # (B, C)
    kv_full = x @ params["wkv"].T                           # (B, N, 2C)

    q = q_full.reshape(B, 1, num_heads, hc).transpose(0, 2, 1, 3)   # (B,H,1,hc)
    kv = kv_full.reshape(B, N, 2, num_heads, hc).transpose(2, 0, 3, 1, 4)
    k, v = kv[0:1], kv[1:2]                                 # (1,B,H,N,hc)

    attn = jnp.matmul(q, jnp.swapaxes(k, -2, -1)) * scale   # (1,B,H,1,N)
    attn = jax.nn.softmax(attn, axis=-1)
    out = jnp.matmul(attn, v)                               # (1,B,H,1,hc)
    out = jnp.swapaxes(out, 1, 2).reshape(B, 1, C)
    out = out @ params["wp"].T + params["bp"]
    return jnp.concatenate([out, x[:, 1:]], axis=1)


if __name__ == "__main__":
    # Small shapes consistent with the module: tokens (B, N, C).
    B, N, C = 2, 8, 32
    NUM_HEADS = 4

    key = jax.random.PRNGKey(0)
    kx, kq, kkv, kp, kb = jax.random.split(key, 5)

    x = jax.random.normal(kx, (B, N, C), dtype=jnp.float32)
    params = {
        "wq": 0.02 * jax.random.normal(kq, (C, C), dtype=jnp.float32),
        "wkv": 0.02 * jax.random.normal(kkv, (2 * C, C), dtype=jnp.float32),
        "wp": 0.02 * jax.random.normal(kp, (C, C), dtype=jnp.float32),
        "bp": 0.02 * jax.random.normal(kb, (C,), dtype=jnp.float32),
    }

    # Compute the reference first: x's buffer is donated to the jitted forward.
    ref = jax.block_until_ready(class_attention_reference(x, params, NUM_HEADS))

    out = class_attention_forward(x, params, NUM_HEADS)
    out = jax.block_until_ready(out)

    assert out.shape == (B, N, C)
    assert out.dtype == jnp.float32
    # Patch tokens are a pass-through of the original f32 x (in-place update).
    assert jnp.allclose(out[:, 1:], ref[:, 1:], atol=1e-6, rtol=1e-6)
    # Class-token row is computed with bf16 MXU inputs / f32 accumulation.
    assert jnp.allclose(out[:, :1], ref[:, :1], atol=5e-3, rtol=5e-2), \
        "class-token mismatch vs reference"

    print("KERNEL_OK")
</pallas_src>

<mosaic_0001>
module attributes {stable_mosaic.version = 11 : i64} {
  func.func @_class_attn_kernel(%arg0: i32, %arg1: memref<2x8x32xf32, #tpu.memory_space<vmem>>, %arg2: memref<2x32xf32, #tpu.memory_space<vmem>>, %arg3: memref<32x32xbf16, #tpu.memory_space<vmem>>, %arg4: memref<32x64xbf16, #tpu.memory_space<vmem>>, %arg5: memref<32x4xbf16, #tpu.memory_space<vmem>>, %arg6: memref<4x32xbf16, #tpu.memory_space<vmem>>, %arg7: memref<2x32xbf16, #tpu.memory_space<vmem>>) attributes {dimension_semantics = [#tpu.dimension_semantics<parallel>], iteration_bounds = array<i64: 1>, scalar_prefetch = 0 : i64, scratch_operands = 0 : i64, tpu.core_type = #tpu.core_type<tc>, window_params = [{transform_indices = @transform_0, window_bounds = array<i64: 2, 8, 32>}, {transform_indices = @transform_1, window_bounds = array<i64: 2, 32>}, {pipeline_mode = #tpu.pipeline_mode<synchronous>, transform_indices = @transform_2, window_bounds = array<i64: 32, 32>}, {pipeline_mode = #tpu.pipeline_mode<synchronous>, transform_indices = @transform_3, window_bounds = array<i64: 32, 64>}, {pipeline_mode = #tpu.pipeline_mode<synchronous>, transform_indices = @transform_4, window_bounds = array<i64: 32, 4>}, {pipeline_mode = #tpu.pipeline_mode<synchronous>, transform_indices = @transform_5, window_bounds = array<i64: 4, 32>}, {transform_indices = @transform_6, window_bounds = array<i64: 2, 32>}]} {
    %c0 = arith.constant 0 : index
    %c0_0 = arith.constant 0 : index
    %c0_1 = arith.constant 0 : index
    %0 = vector.load %arg1[%c0, %c0_0, %c0_1] : memref<2x8x32xf32, #tpu.memory_space<vmem>>, vector<2x8x32xf32>
    %1 = arith.truncf %0 : vector<2x8x32xf32> to vector<2x8x32xbf16>
    %2 = vector.shape_cast %1 : vector<2x8x32xbf16> to vector<16x32xbf16>
    %c0_2 = arith.constant 0 : index
    %c0_3 = arith.constant 0 : index
    %3 = vector.load %arg2[%c0_2, %c0_3] : memref<2x32xf32, #tpu.memory_space<vmem>>, vector<2x32xf32>
    %4 = arith.truncf %3 : vector<2x32xf32> to vector<2x32xbf16>
    %c0_4 = arith.constant 0 : index
    %c0_5 = arith.constant 0 : index
    %5 = vector.load %arg3[%c0_4, %c0_5] : memref<32x32xbf16, #tpu.memory_space<vmem>>, vector<32x32xbf16>
    %cst = arith.constant dense<0.000000e+00> : vector<2x32xf32>
    %6 = tpu.matmul %4, %5, %cst {dimension_numbers = #tpu.dot_dimension_numbers<[1], [0], [0], [1], [0, 0, 1, 1], [], []>} : vector<2x32xbf16>, vector<32x32xbf16>, vector<2x32xf32> -> vector<2x32xf32>
    %c0_6 = arith.constant 0 : index
    %c0_7 = arith.constant 0 : index
    %7 = vector.load %arg4[%c0_6, %c0_7] : memref<32x64xbf16, #tpu.memory_space<vmem>>, vector<32x64xbf16>
    %cst_8 = arith.constant dense<0.000000e+00> : vector<16x64xf32>
    %8 = tpu.matmul %2, %7, %cst_8 {dimension_numbers = #tpu.dot_dimension_numbers<[1], [0], [0], [1], [0, 0, 1, 1], [], []>} : vector<16x32xbf16>, vector<32x64xbf16>, vector<16x64xf32> -> vector<16x64xf32>
    %9 = vector.extract_strided_slice %8 {offsets = [0, 0], sizes = [16, 32], strides = [1, 1]} : vector<16x64xf32> to vector<16x32xf32>
    %10 = vector.shape_cast %9 : vector<16x32xf32> to vector<2x8x32xf32>
    %11 = arith.truncf %10 : vector<2x8x32xf32> to vector<2x8x32xbf16>
    %12 = vector.extract_strided_slice %8 {offsets = [0, 32], sizes = [16, 32], strides = [1, 1]} : vector<16x64xf32> to vector<16x32xf32>
    %13 = vector.shape_cast %12 : vector<16x32xf32> to vector<2x8x32xf32>
    %14 = arith.truncf %13 : vector<2x8x32xf32> to vector<2x8x32xbf16>
    %15 = arith.truncf %6 : vector<2x32xf32> to vector<2x32xbf16>
    %16 = vector.shape_cast %15 : vector<2x32xbf16> to vector<2x1x32xbf16>
    %17 = vector.broadcast %16 : vector<2x1x32xbf16> to vector<2x8x32xbf16>
    %18 = arith.mulf %17, %11 : vector<2x8x32xbf16>
    %19 = vector.shape_cast %18 : vector<2x8x32xbf16> to vector<16x32xbf16>
    %c0_9 = arith.constant 0 : index
    %c0_10 = arith.constant 0 : index
    %20 = vector.load %arg5[%c0_9, %c0_10] : memref<32x4xbf16, #tpu.memory_space<vmem>>, vector<32x4xbf16>
    %cst_11 = arith.constant dense<0.000000e+00> : vector<16x4xf32>
    %21 = tpu.matmul %19, %20, %cst_11 {dimension_numbers = #tpu.dot_dimension_numbers<[1], [0], [0], [1], [0, 0, 1, 1], [], []>} : vector<16x32xbf16>, vector<32x4xbf16>, vector<16x4xf32> -> vector<16x4xf32>
    %22 = vector.shape_cast %21 : vector<16x4xf32> to vector<2x8x4xf32>
    %cst_12 = arith.constant dense<0xFF800000> : vector<2x4xf32>
    %23 = vector.multi_reduction <maximumf>, %22, %cst_12 [1] : vector<2x8x4xf32> to vector<2x4xf32>
    %24 = vector.shape_cast %23 : vector<2x4xf32> to vector<2x1x4xf32>
    %25 = vector.broadcast %24 : vector<2x1x4xf32> to vector<2x8x4xf32>
    %26 = arith.subf %22, %25 : vector<2x8x4xf32>
    %27 = math.exp %26 : vector<2x8x4xf32>
    %cst_13 = arith.constant dense<0.000000e+00> : vector<2x4xf32>
    %28 = vector.multi_reduction <add>, %27, %cst_13 [1] : vector<2x8x4xf32> to vector<2x4xf32>
    %29 = vector.shape_cast %28 : vector<2x4xf32> to vector<2x1x4xf32>
    %30 = tpu.reciprocal %29 {approx = true} : vector<2x1x4xf32> -> vector<2x1x4xf32>
    %31 = vector.broadcast %30 : vector<2x1x4xf32> to vector<2x8x4xf32>
    %32 = arith.mulf %27, %31 : vector<2x8x4xf32>
    %33 = vector.shape_cast %32 : vector<2x8x4xf32> to vector<16x4xf32>
    %34 = arith.truncf %33 : vector<16x4xf32> to vector<16x4xbf16>
    %c0_14 = arith.constant 0 : index
    %c0_15 = arith.constant 0 : index
    %35 = vector.load %arg6[%c0_14, %c0_15] : memref<4x32xbf16, #tpu.memory_space<vmem>>, vector<4x32xbf16>
    %cst_16 = arith.constant dense<0.000000e+00> : vector<16x32xf32>
    %36 = tpu.matmul %34, %35, %cst_16 {dimension_numbers = #tpu.dot_dimension_numbers<[1], [0], [0], [1], [0, 0, 1, 1], [], []>} : vector<16x4xbf16>, vector<4x32xbf16>, vector<16x32xf32> -> vector<16x32xf32>
    %37 = vector.shape_cast %36 : vector<16x32xf32> to vector<2x8x32xf32>
    %38 = arith.extf %14 : vector<2x8x32xbf16> to vector<2x8x32xf32>
    %39 = arith.mulf %37, %38 : vector<2x8x32xf32>
    %cst_17 = arith.constant dense<0.000000e+00> : vector<2x32xf32>
    %40 = vector.multi_reduction <add>, %39, %cst_17 [1] : vector<2x8x32xf32> to vector<2x32xf32>
    %41 = arith.truncf %40 : vector<2x32xf32> to vector<2x32xbf16>
    %c0_18 = arith.constant 0 : index
    %c0_19 = arith.constant 0 : index
    %42 = vector.load %arg7[%c0_18, %c0_19] : memref<2x32xbf16, #tpu.memory_space<vmem>>, vector<2x32xbf16>
    tpu.vector_store %arg7[%c0_18, %c0_19], %41 {strides = array<i32>} : memref<2x32xbf16, #tpu.memory_space<vmem>>, vector<2x32xbf16>,
    return
  }
  func.func @transform_0(%arg0: i32) -> (i32, i32, i32) {
    %c0_i32 = arith.constant 0 : i32
    %c0_i32_0 = arith.constant 0 : i32
    %c0_i32_1 = arith.constant 0 : i32
    return %arg0, %c0_i32, %c0_i32_0 : i32, i32, i32
  }
  func.func @transform_1(%arg0: i32) -> (i32, i32) {
    %c0_i32 = arith.constant 0 : i32
    %c0_i32_0 = arith.constant 0 : i32
    return %arg0, %c0_i32 : i32, i32
  }
  func.func @transform_2(%arg0: i32) -> (i32, i32) {
    %c0_i32 = arith.constant 0 : i32
    %c0_i32_0 = arith.constant 0 : i32
    %c0_i32_1 = arith.constant 0 : i32
    return %c0_i32, %c0_i32_0 : i32, i32
  }
  func.func @transform_3(%arg0: i32) -> (i32, i32) {
    %c0_i32 = arith.constant 0 : i32
    %c0_i32_0 = arith.constant 0 : i32
    %c0_i32_1 = arith.constant 0 : i32
    return %c0_i32, %c0_i32_0 : i32, i32
  }
  func.func @transform_4(%arg0: i32) -> (i32, i32) {
    %c0_i32 = arith.constant 0 : i32
    %c0_i32_0 = arith.constant 0 : i32
    %c0_i32_1 = arith.constant 0 : i32
    return %c0_i32, %c0_i32_0 : i32, i32
  }
  func.func @transform_5(%arg0: i32) -> (i32, i32) {
    %c0_i32 = arith.constant 0 : i32
    %c0_i32_0 = arith.constant 0 : i32
    %c0_i32_1 = arith.constant 0 : i32
    return %c0_i32, %c0_i32_0 : i32, i32
  }
  func.func @transform_6(%arg0: i32) -> (i32, i32) {
    %c0_i32 = arith.constant 0 : i32
    %c0_i32_0 = arith.constant 0 : i32
    return %arg0, %c0_i32 : i32, i32
  }
}

module attributes {stable_mosaic.version = 11 : i64} {
  func.func @_proj_kernel(%arg0: i32, %arg1: memref<2x32xbf16, #tpu.memory_space<vmem>>, %arg2: memref<32x32xbf16, #tpu.memory_space<vmem>>, %arg3: memref<1x32xf32, #tpu.memory_space<vmem>>, %arg4: memref<2x32xf32, #tpu.memory_space<vmem>>) attributes {dimension_semantics = [#tpu.dimension_semantics<arbitrary>], iteration_bounds = array<i64: 1>, scalar_prefetch = 0 : i64, scratch_operands = 0 : i64, tpu.core_type = #tpu.core_type<tc>, window_params = [{pipeline_mode = #tpu.pipeline_mode<synchronous>, transform_indices = @transform_0, window_bounds = array<i64: 2, 32>}, {pipeline_mode = #tpu.pipeline_mode<synchronous>, transform_indices = @transform_1, window_bounds = array<i64: 32, 32>}, {pipeline_mode = #tpu.pipeline_mode<synchronous>, transform_indices = @transform_2, window_bounds = array<i64: 1, 32>}, {pipeline_mode = #tpu.pipeline_mode<synchronous>, transform_indices = @transform_3, window_bounds = array<i64: 2, 32>}]} {
    %c0 = arith.constant 0 : index
    %c0_0 = arith.constant 0 : index
    %0 = vector.load %arg1[%c0, %c0_0] : memref<2x32xbf16, #tpu.memory_space<vmem>>, vector<2x32xbf16>
    %c0_1 = arith.constant 0 : index
    %c0_2 = arith.constant 0 : index
    %1 = vector.load %arg2[%c0_1, %c0_2] : memref<32x32xbf16, #tpu.memory_space<vmem>>, vector<32x32xbf16>
    %cst = arith.constant dense<0.000000e+00> : vector<2x32xf32>
    %2 = tpu.matmul %0, %1, %cst {dimension_numbers = #tpu.dot_dimension_numbers<[1], [0], [0], [1], [0, 0, 1, 1], [], []>} : vector<2x32xbf16>, vector<32x32xbf16>, vector<2x32xf32> -> vector<2x32xf32>
    %c0_3 = arith.constant 0 : index
    %c0_4 = arith.constant 0 : index
    %3 = vector.load %arg3[%c0_3, %c0_4] : memref<1x32xf32, #tpu.memory_space<vmem>>, vector<1x32xf32>
    %4 = vector.broadcast %3 : vector<1x32xf32> to vector<2x32xf32>
    %5 = arith.addf %2, %4 : vector<2x32xf32>
    %c0_5 = arith.constant 0 : index
    %c0_6 = arith.constant 0 : index
    %6 = vector.load %arg4[%c0_5, %c0_6] : memref<2x32xf32, #tpu.memory_space<vmem>>, vector<2x32xf32>
    tpu.vector_store %arg4[%c0_5, %c0_6], %5 {strides = array<i32>} : memref<2x32xf32, #tpu.memory_space<vmem>>, vector<2x32xf32>,
    return
  }
  func.func @transform_0(%arg0: i32) -> (i32, i32) {
    %c0_i32 = arith.constant 0 : i32
    %c0_i32_0 = arith.constant 0 : i32
    %c0_i32_1 = arith.constant 0 : i32
    return %c0_i32, %c0_i32_0 : i32, i32
  }
  func.func @transform_1(%arg0: i32) -> (i32, i32) {
    %c0_i32 = arith.constant 0 : i32
    %c0_i32_0 = arith.constant 0 : i32
    %c0_i32_1 = arith.constant 0 : i32
    return %c0_i32, %c0_i32_0 : i32, i32
  }
  func.func @transform_2(%arg0: i32) -> (i32, i32) {
    %c0_i32 = arith.constant 0 : i32
    %c0_i32_0 = arith.constant 0 : i32
    %c0_i32_1 = arith.constant 0 : i32
    return %c0_i32, %c0_i32_0 : i32, i32
  }
  func.func @transform_3(%arg0: i32) -> (i32, i32) {
    %c0_i32 = arith.constant 0 : i32
    %c0_i32_0 = arith.constant 0 : i32
    %c0_i32_1 = arith.constant 0 : i32
    return %c0_i32, %c0_i32_0 : i32, i32
  }
}

</mosaic_0001>

<llo_original>
// kernel: class_attention_forward.3
$region0: #{class_attention_forward.3}
  #allocation0 [shape = 'u32[]', space=smem, size = 0x4, offset = 0x4, fixed_abs, tag = 'smem constant byte address 0x4 - core index']
  #allocation1 [shape = 'u32[144,128]{1,0:T(1,128)}', space=vmem, size = 0x12000, scoped, tag = 'internal scratch']
  %s0 = inlined_call_operand.vmem [shape: bf16[2,32], index: 0, kind: input, shape index: {}]
  %s1 = inlined_call_operand.vmem [shape: bf16[32,32], index: 1, kind: input, shape index: {}]
  %s2 = inlined_call_operand.vmem [shape: f32[1,32], index: 2, kind: input, shape index: {}]
  %s3 = inlined_call_operand.vmem [shape: f32[2,32], index: 3, kind: output, shape index: {}]
  %s4 = sld [smem:[#allocation0]]
  $region22: #{class_attention_forward.3} parent=0
    _
  %s6 = ssub.s32 1, %s4
  %s7 = scalar_select 0, %s6, %s4
  // Predicated region
  $region2: #{class_attention_forward.3} parent=0 // pred_check
    _
  $region3: #{class_attention_forward.3} parent=0 // pred_check_branch
    %9 = sbr.rel (0) target = $region5
  $region4: #{class_attention_forward.3} parent=0 // pred_region
    _
  $region5: #{class_attention_forward.3} parent=0 // pred_fallthru
    _
  // Predicated region
  $region6: #{class_attention_forward.3} parent=0 // pred_check
    _
  $region7: #{class_attention_forward.3} parent=0 // pred_check_branch
    %11 = sbr.rel (0) target = $region9
  $region8: #{class_attention_forward.3} parent=0 // pred_region
    _
  $region9: #{class_attention_forward.3} parent=0 // pred_fallthru
    _
  // Predicated region
  $region10: #{class_attention_forward.3} parent=0 // pred_check
    _
  $region11: #{class_attention_forward.3} parent=0 // pred_check_branch
    %13 = sbr.rel (0) target = $region13
  $region12: #{class_attention_forward.3} parent=0 // pred_region
    _
  $region13: #{class_attention_forward.3} parent=0 // pred_fallthru
    _
  %v15 = vld [vmem:[%s0] sm:$0x1]
  %v16 = vld [vmem:[%s1] sm:$0xf]
  %v17 = vld [vmem:[%s1 + $0x4] sm:$0xf]
  %v18 = vld [vmem:[%s1 + $0x8] sm:$0xf]
  %v19 = vld [vmem:[%s1 + $0xc] sm:$0xf]
  %v20 = vld [vmem:[%s2] sm:$0x1]
  %v22 = vlaneseq
  %v23 = vshrl.u32 %v22, 7
  %v24 = vsub.s32 0, %v23
  %v25 = vrot.slane %v20, %v24
  %v31 = vunpack.c.l.b16 %v16
  %v32 = vunpack.c.l.b16 %v17
  %v33 = vunpack.c.l.b16 %v18
  %v34 = vunpack.c.l.b16 %v19
  %v35 = vpack.c.b16 %v32, %v31
  %v36 = vpack.c.b16 %v34, %v33
  %vm39 = vcmask 261120
  %v41 = vsel %vm39, %v15, 0
  %43 = vmatprep.subr.bf16.mxu0 0
  %44 = vmatpush1.bf16.msra.mxu0 %v35
  %45 = vmatprep.subr.bf16.mxu0 0
  %46 = vmatpush1.bf16.msra.mxu0 %v36
  %47 = vmatprep.subr.bf16.mxu0 0
  %48 = vmatpush1.bf16.msra.mxu0 0
  %49 = vmatprep.subr.bf16.mxu0 0
  %50 = vmatpush1.bf16.msra.mxu0 0
  %51 = vmatprep.subr.bf16.mxu0 0
  %52 = vmatpush1.bf16.msra.mxu0 0
  %53 = vmatprep.subr.bf16.mxu0 0
  %54 = vmatpush1.bf16.msra.mxu0 0
  %55 = vmatprep.subr.bf16.mxu0 0
  %56 = vmatpush1.bf16.msra.mxu0 0
  %57 = vmatprep.subr.bf16.mxu0 0
  %58 = vmatpush1.bf16.msra.mxu0 0
  %59 = vmatprep.subr.bf16.mxu0 0
  %60 = vmatpush1.bf16.msra.mxu0 0
  %61 = vmatprep.subr.bf16.mxu0 0
  %62 = vmatpush1.bf16.msra.mxu0 0
  %63 = vmatprep.subr.bf16.mxu0 0
  %64 = vmatpush1.bf16.msra.mxu0 0
  %65 = vmatprep.subr.bf16.mxu0 0
  %66 = vmatpush1.bf16.msra.mxu0 0
  %67 = vmatprep.subr.bf16.mxu0 0
  %68 = vmatpush1.bf16.msra.mxu0 0
  %69 = vmatprep.subr.bf16.mxu0 0
  %70 = vmatpush1.bf16.msra.mxu0 0
  %71 = vmatprep.subr.bf16.mxu0 0
  %72 = vmatpush1.bf16.msra.mxu0 0
  %73 = vmatprep.subr.bf16.mxu0 0
  %74 = vmatpush1.bf16.msra.mxu0 0
  %75 = vmatprep.mubr.bf16.mxu0 0
  %76 = vmatmul.mubr.bf16.gmra.mrb[0].mxu0 %v41
  %v77 = vpop.f32.mrb[0].mxu0
  %v78 = vadd.f32 %v25, %v77
  %v79 = vpop.f32.mrb[0].mxu0
  %v80 = vpop.f32.mrb[0].mxu0
  %v81 = vpop.f32.mrb[0].mxu0
  %82 = vdwg.mxu0
  %vm83 = vcmask 254976
  %84 = vst.msk [vmem:[%s3] sm:$0x3] %vm83, %v78
  // Predicated region
  $region14: #{class_attention_forward.3} parent=0 // pred_check
    _
  $region15: #{class_attention_forward.3} parent=0 // pred_check_branch
    %86 = sbr.rel (0) target = $region17
  $region16: #{class_attention_forward.3} parent=0 // pred_region
    _
  $region17: #{class_attention_forward.3} parent=0 // pred_fallthru
    _
  // Predicated region
  $region18: #{class_attention_forward.3} parent=0 // pred_check
    _
  $region19: #{class_attention_forward.3} parent=0 // pred_check_branch
    %88 = sbr.rel (0) target = $region21
  $region20: #{class_attention_forward.3} parent=0 // pred_region
    _
  $region21: #{class_attention_forward.3} parent=0 // pred_fallthru
    _

// kernel: class_attention_forward.2
$region0: #{class_attention_forward.2}
  #allocation0 [shape = 'u32[]', space=smem, size = 0x4, offset = 0x4, fixed_abs, tag = 'smem constant byte address 0x4 - core index']
  #allocation1 [shape = 'u32[144,128]{1,0:T(1,128)}', space=vmem, size = 0x12000, scoped, tag = 'internal scratch']
  %s0 = inlined_call_operand.vmem [shape: f32[2,8,32], index: 0, kind: input, shape index: {}]
  %s1 = inlined_call_operand.vmem [shape: f32[2,32], index: 1, kind: input, shape index: {}]
  %s2 = inlined_call_operand.vmem [shape: bf16[32,32], index: 2, kind: input, shape index: {}]
  %s3 = inlined_call_operand.vmem [shape: bf16[32,64], index: 3, kind: input, shape index: {}]
  %s4 = inlined_call_operand.vmem [shape: bf16[32,4], index: 4, kind: input, shape index: {}]
  %s5 = inlined_call_operand.vmem [shape: bf16[4,32], index: 5, kind: input, shape index: {}]
  %s6 = inlined_call_operand.vmem [shape: bf16[2,32], index: 6, kind: output, shape index: {}]
  %s7 = sld [smem:[#allocation0]]
  $region34: #{class_attention_forward.2} parent=0
    _
  %s9 = ssub.s32 1, %s7
  %s10 = scalar_select 0, %s9, %s7
  // Predicated region
  $region2: #{class_attention_forward.2} parent=0 // pred_check
    _
  $region3: #{class_attention_forward.2} parent=0 // pred_check_branch
    %12 = sbr.rel (0) target = $region5
  $region4: #{class_attention_forward.2} parent=0 // pred_region
    _
  $region5: #{class_attention_forward.2} parent=0 // pred_fallthru
    _
  // Predicated region
  $region6: #{class_attention_forward.2} parent=0 // pred_check
    _
  $region7: #{class_attention_forward.2} parent=0 // pred_check_branch
    %14 = sbr.rel (0) target = $region9
  $region8: #{class_attention_forward.2} parent=0 // pred_region
    _
  $region9: #{class_attention_forward.2} parent=0 // pred_fallthru
    _
  // Predicated region
  $region10: #{class_attention_forward.2} parent=0 // pred_check
    _
  $region11: #{class_attention_forward.2} parent=0 // pred_check_branch
    %16 = sbr.rel (0) target = $region13
  $region12: #{class_attention_forward.2} parent=0 // pred_region
    _
  $region13: #{class_attention_forward.2} parent=0 // pred_fallthru
    _
  // Predicated region
  $region14: #{class_attention_forward.2} parent=0 // pred_check
    _
  $region15: #{class_attention_forward.2} parent=0 // pred_check_branch
    %18 = sbr.rel (0) target = $region17
  $region16: #{class_attention_forward.2} parent=0 // pred_region
    _
  $region17: #{class_attention_forward.2} parent=0 // pred_fallthru
    _
  // Predicated region
  $region18: #{class_attention_forward.2} parent=0 // pred_check
    _
  $region19: #{class_attention_forward.2} parent=0 // pred_check_branch
    %20 = sbr.rel (0) target = $region21
  $region20: #{class_attention_forward.2} parent=0 // pred_region
    _
  $region21: #{class_attention_forward.2} parent=0 // pred_fallthru
    _
  // Predicated region
  $region22: #{class_attention_forward.2} parent=0 // pred_check
    _
  $region23: #{class_attention_forward.2} parent=0 // pred_check_branch
    %22 = sbr.rel (0) target = $region25
  $region24: #{class_attention_forward.2} parent=0 // pred_region
    _
  $region25: #{class_attention_forward.2} parent=0 // pred_fallthru
    _
  %v24 = vld [vmem:[%s0] sm:$0xff]
  %v25 = vld [vmem:[%s0 + $0x8] sm:$0xff]
  %v26 = vpack.c.bf16 %v24, %v24
  %v27 = vpack.c.bf16 %v25, %v25
  %v28 = vld [vmem:[%s1] sm:$0x3]
  %v29 = vpack.c.bf16 %v28, %v28
  %v30 = vld [vmem:[%s2] sm:$0xf]
  %v31 = vld [vmem:[%s2 + $0x4] sm:$0xf]
  %v32 = vld [vmem:[%s2 + $0x8] sm:$0xf]
  %v33 = vld [vmem:[%s2 + $0xc] sm:$0xf]
  %v38 = vunpack.c.l.b16 %v30
  %v39 = vunpack.c.l.b16 %v31
  %v40 = vunpack.c.l.b16 %v32
  %v41 = vunpack.c.l.b16 %v33
  %v42 = vpack.c.b16 %v39, %v38
  %v43 = vpack.c.b16 %v41, %v40
  %vm46 = vcmask 261120
  %v48 = vsel %vm46, %v29, 0
  %50 = vmatprep.subr.bf16.mxu0 0
  %51 = vmatpush1.bf16.msra.mxu0 %v42
  %52 = vmatprep.subr.bf16.mxu0 0
  %53 = vmatpush1.bf16.msra.mxu0 %v43
  %54 = vmatprep.subr.bf16.mxu0 0
  %55 = vmatpush1.bf16.msra.mxu0 0
  %56 = vmatprep.subr.bf16.mxu0 0
  %57 = vmatpush1.bf16.msra.mxu0 0
  %58 = vmatprep.subr.bf16.mxu0 0
  %59 = vmatpush1.bf16.msra.mxu0 0
  %60 = vmatprep.subr.bf16.mxu0 0
  %61 = vmatpush1.bf16.msra.mxu0 0
  %62 = vmatprep.subr.bf16.mxu0 0
  %63 = vmatpush1.bf16.msra.mxu0 0
  %64 = vmatprep.subr.bf16.mxu0 0
  %65 = vmatpush1.bf16.msra.mxu0 0
  %66 = vmatprep.subr.bf16.mxu0 0
  %67 = vmatpush1.bf16.msra.mxu0 0
  %68 = vmatprep.subr.bf16.mxu0 0
  %69 = vmatpush1.bf16.msra.mxu0 0
  %70 = vmatprep.subr.bf16.mxu0 0
  %71 = vmatpush1.bf16.msra.mxu0 0
  %72 = vmatprep.subr.bf16.mxu0 0
  %73 = vmatpush1.bf16.msra.mxu0 0
  %74 = vmatprep.subr.bf16.mxu0 0
  %75 = vmatpush1.bf16.msra.mxu0 0
  %76 = vmatprep.subr.bf16.mxu0 0
  %77 = vmatpush1.bf16.msra.mxu0 0
  %78 = vmatprep.subr.bf16.mxu0 0
  %79 = vmatpush1.bf16.msra.mxu0 0
  %80 = vmatprep.subr.bf16.mxu0 0
  %81 = vmatpush1.bf16.msra.mxu0 0
  %82 = vmatprep.mubr.bf16.mxu0 0
  %83 = vmatmul.mubr.bf16.gmra.mrb[0].mxu0 %v48
  %v84 = vpop.f32.mrb[0].mxu0
  %v85 = vadd.f32 0.0, %v84
  %v86 = vpop.f32.mrb[0].mxu0
  %v87 = vpop.f32.mrb[0].mxu0
  %v88 = vpop.f32.mrb[0].mxu0
  %89 = vdwg.mxu0
  %v90 = vld [vmem:[%s3] sm:$0xf]
  %v91 = vld [vmem:[%s3 + $0x4] sm:$0xf]
  %v92 = vld [vmem:[%s3 + $0x8] sm:$0xf]
  %v93 = vld [vmem:[%s3 + $0xc] sm:$0xf]
  %v96 = vunpack.c.l.b16 %v26
  %v97 = vunpack.c.l.b16 %v27
  %v98 = vpack.c.b16 %v97, %v96
  %v103 = vunpack.c.l.b16 %v90
  %v104 = vunpack.c.l.b16 %v91
  %v105 = vunpack.c.l.b16 %v92
  %v106 = vunpack.c.l.b16 %v93
  %v107 = vpack.c.b16 %v104, %v103
  %v108 = vpack.c.b16 %v106, %v105
  %v112 = vsel %vm46, %v98, 0
  %114 = vmatprep.subr.bf16.mxu0 0
  %115 = vmatpush1.bf16.msra.mxu0 %v107
  %116 = vmatprep.subr.bf16.mxu0 0
  %117 = vmatpush1.bf16.msra.mxu0 %v108
  %118 = vmatprep.subr.bf16.mxu0 0
  %119 = vmatpush1.bf16.msra.mxu0 0
  %120 = vmatprep.subr.bf16.mxu0 0
  %121 = vmatpush1.bf16.msra.mxu0 0
  %122 = vmatprep.subr.bf16.mxu0 0
  %123 = vmatpush1.bf16.msra.mxu0 0
  %124 = vmatprep.subr.bf16.mxu0 0
  %125 = vmatpush1.bf16.msra.mxu0 0
  %126 = vmatprep.subr.bf16.mxu0 0
  %127 = vmatpush1.bf16.msra.mxu0 0
  %128 = vmatprep.subr.bf16.mxu0 0
  %129 = vmatpush1.bf16.msra.mxu0 0
  %130 = vmatprep.subr.bf16.mxu0 0
  %131 = vmatpush1.bf16.msra.mxu0 0
  %132 = vmatprep.subr.bf16.mxu0 0
  %133 = vmatpush1.bf16.msra.mxu0 0
  %134 = vmatprep.subr.bf16.mxu0 0
  %135 = vmatpush1.bf16.msra.mxu0 0
  %136 = vmatprep.subr.bf16.mxu0 0
  %137 = vmatpush1.bf16.msra.mxu0 0
  %138 = vmatprep.subr.bf16.mxu0 0
  %139 = vmatpush1.bf16.msra.mxu0 0
  %140 = vmatprep.subr.bf16.mxu0 0
  %141 = vmatpush1.bf16.msra.mxu0 0
  %142 = vmatprep.subr.bf16.mxu0 0
  %143 = vmatpush1.bf16.msra.mxu0 0
  %144 = vmatprep.subr.bf16.mxu0 0
  %145 = vmatpush1.bf16.msra.mxu0 0
  %146 = vmatprep.mubr.bf16.mxu0 0
  %147 = vmatmul.mubr.bf16.gmra.mrb[0].mxu0 %v112
  %v148 = vpop.f32.mrb[0].mxu0
  %v149 = vadd.f32 0.0, %v148
  %v150 = vpop.f32.mrb[0].mxu0
  %v151 = vpop.f32.mrb[0].mxu0
  %v152 = vadd.f32 0.0, %v151
  %v153 = vpop.f32.mrb[0].mxu0
  %154 = vdwg.mxu0
  %v155 = vpack.c.bf16 %v149, %v149
  %v156 = vpack.c.bf16 %v152, %v152
  %v157 = vpack.c.bf16 %v85, %v85
  %v160 = vunpack.c.l.s4 1966171168
  %v161 = vunpack.c.0.s8 %v160
  %v162 = vlaneseq
  %v163 = vshrl.u32 %v162, 7
  %v164 = vsub.s32 %v161, %v163
  %v165 = vrot.slane %v157, %v164
  %v167 = vunpack.c.l.s4 1966171168
  %v168 = vunpack.c.0.s8 %v167
  %v169 = vlaneseq
  %v170 = vshrl.u32 %v169, 7
  %v171 = vsub.s32 %v168, %v170
  %v172 = vrot.slane %v165, %v171
  %v173 = vunpack.i.l.s16 %v172
  %v174 = vunpack.i.h.s16 %v172
  %v175 = vpack.i.b16 %v173, %v173
  %v176 = vpack.i.b16 %v174, %v174
  %v177 = vlaneseq
  %v178 = vshrl.u32 %v177, 7
  %v179 = vsub.s32 0, %v178
  %v180 = vrot.slane %v175, %v179
  %v181 = vlaneseq
  %v182 = vshrl.u32 %v181, 7
  %v183 = vsub.s32 0, %v182
  %v184 = vrot.slane %v176, %v183
  %v186 = vpack.i.b16 %v180, %v180
  %v188 = vlaneseq
  %v189 = vshrl.u32 %v188, 7
  %v190 = vsub.s32 0, %v189
  %v191 = vrot.slane %v186, %v190
  %v193 = vpack.i.b16 %v184, %v184
  %v195 = vlaneseq
  %v196 = vshrl.u32 %v195, 7
  %v197 = vsub.s32 0, %v196
  %v198 = vrot.slane %v193, %v197
  %v199 = vmul.bf16 %v191, %v155
  %v200 = vmul.bf16 %v198, %v156
  %v201 = vld [vmem:[%s4] sm:$0xf]
  %v202 = vld [vmem:[%s4 + $0x4] sm:$0xf]
  %v203 = vld [vmem:[%s4 + $0x8] sm:$0xf]
  %v204 = vld [vmem:[%s4 + $0xc] sm:$0xf]
  %v207 = vunpack.c.l.b16 %v199
  %v208 = vunpack.c.l.b16 %v200
  %v209 = vpack.c.b16 %v208, %v207
  %v214 = vunpack.c.l.b16 %v201
  %v215 = vunpack.c.l.b16 %v202
  %v216 = vunpack.c.l.b16 %v203
  %v217 = vunpack.c.l.b16 %v204
  %v218 = vpack.c.b16 %v215, %v214
  %v219 = vpack.c.b16 %v217, %v216
  %v223 = vsel %vm46, %v209, 0
  %225 = vmatprep.subr.bf16.mxu0 0
  %226 = vmatpush1.bf16.msra.mxu0 %v218
  %227 = vmatprep.subr.bf16.mxu0 0
  %228 = vmatpush1.bf16.msra.mxu0 %v219
  %229 = vmatprep.subr.bf16.mxu0 0
  %230 = vmatpush1.bf16.msra.mxu0 0
  %231 = vmatprep.subr.bf16.mxu0 0
  %232 = vmatpush1.bf16.msra.mxu0 0
  %233 = vmatprep.subr.bf16.mxu0 0
  %234 = vmatpush1.bf16.msra.mxu0 0
  %235 = vmatprep.subr.bf16.mxu0 0
  %236 = vmatpush1.bf16.msra.mxu0 0
  %237 = vmatprep.subr.bf16.mxu0 0
  %238 = vmatpush1.bf16.msra.mxu0 0
  %239 = vmatprep.subr.bf16.mxu0 0
  %240 = vmatpush1.bf16.msra.mxu0 0
  %241 = vmatprep.subr.bf16.mxu0 0
  %242 = vmatpush1.bf16.msra.mxu0 0
  %243 = vmatprep.subr.bf16.mxu0 0
  %244 = vmatpush1.bf16.msra.mxu0 0
  %245 = vmatprep.subr.bf16.mxu0 0
  %246 = vmatpush1.bf16.msra.mxu0 0
  %247 = vmatprep.subr.bf16.mxu0 0
  %248 = vmatpush1.bf16.msra.mxu0 0
  %249 = vmatprep.subr.bf16.mxu0 0
  %250 = vmatpush1.bf16.msra.mxu0 0
  %251 = vmatprep.subr.bf16.mxu0 0
  %252 = vmatpush1.bf16.msra.mxu0 0
  %253 = vmatprep.subr.bf16.mxu0 0
  %254 = vmatpush1.bf16.msra.mxu0 0
  %255 = vmatprep.subr.bf16.mxu0 0
  %256 = vmatpush1.bf16.msra.mxu0 0
  %257 = vmatprep.mubr.bf16.mxu0 0
  %258 = vmatmul.mubr.bf16.gmra.mrb[0].mxu0 %v223
  %v259 = vpop.f32.mrb[0].mxu0
  %v260 = vadd.f32 0.0, %v259
  %v261 = vpop.f32.mrb[0].mxu0
  %v262 = vpop.f32.mrb[0].mxu0
  %v263 = vadd.f32 0.0, %v262
  %v264 = vpop.f32.mrb[0].mxu0
  %265 = vdwg.mxu0
  %vm266 = vcmask 31744
  %v267 = vsel %vm266, %v260, -inf
  %v268 = vrot.slane %v267, 4
  %v269 = vmax.f32 %v267, %v268
  %v270 = vrot.slane %v269, 2
  %v271 = vmax.f32 %v269, %v270
  %v272 = vrot.slane %v271, 1
  %v273 = vmax.f32 %v271, %v272
  %v274 = vsel %vm266, %v263, -inf
  %v275 = vrot.slane %v274, 4
  %v276 = vmax.f32 %v274, %v275
  %v277 = vrot.slane %v276, 2
  %v278 = vmax.f32 %v276, %v277
  %v279 = vrot.slane %v278, 1
  %v280 = vmax.f32 %v278, %v279
  %v281 = vsub.f32 %v260, %v273
  %v282 = vsub.f32 %v263, %v280
  %v283 = vmul.f32 %v281, 1.442695
  %v284 = vpow.pop %v283
  %v285 = vmul.f32 %v282, 1.442695
  %v286 = vpow.pop %v285
  %v287 = vsel %vm266, %v284, 0.0
  %v288 = vrot.slane %v287, 4
  %v289 = vadd.f32 %v287, %v288
  %v290 = vrot.slane %v289, 2
  %v291 = vadd.f32 %v289, %v290
  %v292 = vrot.slane %v291, 1
  %v293 = vadd.f32 %v291, %v292
  %v294 = vsel %vm266, %v286, 0.0
  %v295 = vrot.slane %v294, 4
  %v296 = vadd.f32 %v294, %v295
  %v297 = vrot.slane %v296, 2
  %v298 = vadd.f32 %v296, %v297
  %v299 = vrot.slane %v298, 1
  %v300 = vadd.f32 %v298, %v299
  %v301 = vrcp.pop %v293
  %v302 = vrcp.pop %v300
  %v303 = vmul.f32 %v284, %v301
  %v304 = vmul.f32 %v286, %v302
  %v305 = vpack.c.bf16 %v304, %v303
  %v306 = vld [vmem:[%s5] sm:$0x3]
  %v308 = vsel %vm266, %v305, 0
  %vm310 = vcmask 1041408
  %v312 = vsel %vm310, %v306, 0
  %314 = vmatprep.subr.bf16.mxu0 0
  %315 = vmatpush1.bf16.msra.mxu0 %v312
  %316 = vmatprep.subr.bf16.mxu0 0
  %317 = vmatpush1.bf16.msra.mxu0 0
  %318 = vmatprep.subr.bf16.mxu0 0
  %319 = vmatpush1.bf16.msra.mxu0 0
  %320 = vmatprep.subr.bf16.mxu0 0
  %321 = vmatpush1.bf16.msra.mxu0 0
  %322 = vmatprep.subr.bf16.mxu0 0
  %323 = vmatpush1.bf16.msra.mxu0 0
  %324 = vmatprep.subr.bf16.mxu0 0
  %325 = vmatpush1.bf16.msra.mxu0 0
  %326 = vmatprep.subr.bf16.mxu0 0
  %327 = vmatpush1.bf16.msra.mxu0 0
  %328 = vmatprep.subr.bf16.mxu0 0
  %329 = vmatpush1.bf16.msra.mxu0 0
  %330 = vmatprep.subr.bf16.mxu0 0
  %331 = vmatpush1.bf16.msra.mxu0 0
  %332 = vmatprep.subr.bf16.mxu0 0
  %333 = vmatpush1.bf16.msra.mxu0 0
  %334 = vmatprep.subr.bf16.mxu0 0
  %335 = vmatpush1.bf16.msra.mxu0 0
  %336 = vmatprep.subr.bf16.mxu0 0
  %337 = vmatpush1.bf16.msra.mxu0 0
  %338 = vmatprep.subr.bf16.mxu0 0
  %339 = vmatpush1.bf16.msra.mxu0 0
  %340 = vmatprep.subr.bf16.mxu0 0
  %341 = vmatpush1.bf16.msra.mxu0 0
  %342 = vmatprep.subr.bf16.mxu0 0
  %343 = vmatpush1.bf16.msra.mxu0 0
  %344 = vmatprep.subr.bf16.mxu0 0
  %345 = vmatpush1.bf16.msra.mxu0 0
  %346 = vmatprep.mubr.bf16.mxu0 0
  %347 = vmatmul.mubr.bf16.gmra.mrb[0].mxu0 %v308
  %v348 = vpop.f32.mrb[0].mxu0
  %v349 = vadd.f32 0.0, %v348
  %v350 = vpop.f32.mrb[0].mxu0
  %v351 = vpop.f32.mrb[0].mxu0
  %v352 = vadd.f32 0.0, %v351
  %v353 = vpop.f32.mrb[0].mxu0
  %354 = vdwg.mxu0
  %v355 = vunpack.c.l.bf16 %v155
  %v356 = vunpack.c.l.bf16 %v156
  %359 = vrot.lane.b32.xlu0 %v355, 96
  %v360 = vpop.permute.xlu0 %359
  %361 = vrot.lane.b32.xlu0 %v356, 96
  %v362 = vpop.permute.xlu0 %361
  %v365 = vmul.f32 %v349, %v360
  %v366 = vmul.f32 %v352, %v362
  %v367 = vsel %vm46, %v365, 0.0
  %v368 = vrot.slane %v367, 4
  %v369 = vadd.f32 %v367, %v368
  %v370 = vrot.slane %v369, 2
  %v371 = vadd.f32 %v369, %v370
  %v372 = vrot.slane %v371, 1
  %v373 = vadd.f32 %v371, %v372
  %v374 = vsel %vm46, %v366, 0.0
  %v375 = vrot.slane %v374, 4
  %v376 = vadd.f32 %v374, %v375
  %v377 = vrot.slane %v376, 2
  %v378 = vadd.f32 %v376, %v377
  %v379 = vrot.slane %v378, 1
  %v380 = vadd.f32 %v378, %v379
  %v381 = vpack.c.bf16 %v373, %v373
  %v382 = vpack.c.bf16 %v380, %v380
  %v386 = vunpack.c.l.s4 1966171168
  %v387 = vunpack.c.0.s8 %v386
  %v388 = vlaneseq
  %v389 = vshrl.u32 %v388, 7
  %v390 = vsub.s32 %v387, %v389
  %v391 = vrot.slane %v381, %v390
  %v393 = vunpack.c.l.s4 1966171168
  %v394 = vunpack.c.0.s8 %v393
  %v395 = vlaneseq
  %v396 = vshrl.u32 %v395, 7
  %v397 = vsub.s32 %v394, %v396
  %v398 = vrot.slane %v391, %v397
  %v400 = vunpack.c.l.s4 1966171168
  %v401 = vunpack.c.0.s8 %v400
  %v402 = vlaneseq
  %v403 = vshrl.u32 %v402, 7
  %v404 = vsub.s32 %v401, %v403
  %v405 = vrot.slane %v382, %v404
  %v407 = vunpack.c.l.s4 1966171168
  %v408 = vunpack.c.0.s8 %v407
  %v409 = vlaneseq
  %v410 = vshrl.u32 %v409, 7
  %v411 = vsub.s32 %v408, %v410
  %v412 = vrot.slane %v405, %v411
  %v414 = vunpack.c.l.s4 1935823168
  %v415 = vunpack.c.0.s8 %v414
  %v416 = vlaneseq
  %v417 = vshrl.u32 %v416, 7
  %v418 = vsub.s32 %v415, %v417
  %v419 = vrot.slane %v398, %v418
  %v421 = vunpack.c.l.s4 1935823168
  %v422 = vunpack.c.0.s8 %v421
  %v423 = vlaneseq
  %v424 = vshrl.u32 %v423, 7
  %v425 = vsub.s32 %v422, %v424
  %v426 = vrot.slane %v419, %v425
  %v428 = vunpack.c.l.s4 1935823168
  %v429 = vunpack.c.0.s8 %v428
  %v430 = vlaneseq
  %v431 = vshrl.u32 %v430, 7
  %v432 = vsub.s32 %v429, %v431
  %v433 = vrot.slane %v412, %v432
  %v435 = vunpack.c.l.s4 1935823168
  %v436 = vunpack.c.0.s8 %v435
  %v437 = vlaneseq
  %v438 = vshrl.u32 %v437, 7
  %v439 = vsub.s32 %v436, %v438
  %v440 = vrot.slane %v433, %v439
  %v441 = vunpack.c.l.b16 %v426
  %v442 = vunpack.c.l.b16 %v440
  %v443 = vrot.slane %v442, 7
  %vm444 = vcmask 1041409
  %v445 = vsel %vm444, %v443, %v441
  %v446 = vpack.c.b16 %v445, %v445
  %v448 = vunpack.c.l.s4 1966171168
  %v449 = vunpack.c.0.s8 %v448
  %v450 = vlaneseq
  %v451 = vshrl.u32 %v450, 7
  %v452 = vsub.s32 %v449, %v451
  %v453 = vrot.slane %v446, %v452
  %v455 = vunpack.c.l.s4 1966171168
  %v456 = vunpack.c.0.s8 %v455
  %v457 = vlaneseq
  %v458 = vshrl.u32 %v457, 7
  %v459 = vsub.s32 %v456, %v458
  %v460 = vrot.slane %v453, %v459
  %vm462 = vcmask 253952
  %463 = vst.msk [vmem:[%s6] sm:$0x1] %vm462, %v460
  // Predicated region
  $region26: #{class_attention_forward.2} parent=0 // pred_check
    _
  $region27: #{class_attention_forward.2} parent=0 // pred_check_branch
    %465 = sbr.rel (0) target = $region29
  $region28: #{class_attention_forward.2} parent=0 // pred_region
    _
  $region29: #{class_attention_forward.2} parent=0 // pred_fallthru
    _
  // Predicated region
  $region30: #{class_attention_forward.2} parent=0 // pred_check
    _
  $region31: #{class_attention_forward.2} parent=0 // pred_check_branch
    %467 = sbr.rel (0) target = $region33
  $region32: #{class_attention_forward.2} parent=0 // pred_region
    _
  $region33: #{class_attention_forward.2} parent=0 // pred_fallthru
    _

</llo_original>
